<compile_context>
chip_gen: v5e
topology: v5e:2x2
jax: 0.10.0
libtpu: 0.0.40
codegen_flags: <defaults>
</compile_context>

<pallas_src>
import functools

import jax
import jax.numpy as jnp
from jax import lax
from jax.experimental import pallas as pl
from jax.experimental.pallas import tpu as pltpu

BN_EPS = 1e-5
IN_FEATURES = 50
HIDDEN = 512
OUT_FEATURES = 10
OUT_PADDED = 128  # lane-dense output width for the final store


# ---------------------------------------------------------------------------
# Generation-aware sizing
# ---------------------------------------------------------------------------
def _tpu_vmem_capacity_bytes():
    try:
        return int(pltpu.get_tpu_info().vmem_capacity_bytes)
    except Exception:
        return 64 * 1024 * 1024  # conservative default (v7x per-TensorCore VMEM)


def _tile_config(n_rows):
    """Batch tile (multiple of 8) and VMEM limit derived from the device."""
    cap = _tpu_vmem_capacity_bytes()
    target_tn = 2048 if cap <= 64 * 1024 * 1024 else 4096
    n8 = max(8, -(-n_rows // 8) * 8)          # round batch up to a multiple of 8
    tn = min(target_tn, n8)
    vmem_limit = min(cap * 3 // 4, 100 * 1024 * 1024)
    return tn, vmem_limit


# ---------------------------------------------------------------------------
# Kernels
# ---------------------------------------------------------------------------
def bn_stats_kernel(x_ref, w1_ref, sum_ref, sumsq_ref):
    """Pass 1: accumulate per-feature sum and sum-of-squares of h = x @ w1 (f32 acc)."""
    @pl.when(pl.program_id(0) == 0)
    def _():
        sum_ref[...] = jnp.zeros_like(sum_ref)
        sumsq_ref[...] = jnp.zeros_like(sumsq_ref)

    h = jnp.dot(x_ref[...], w1_ref[...], preferred_element_type=jnp.float32)  # (TN, 512) f32
    sum_ref[...] += jnp.sum(h, axis=0, keepdims=True)
    sumsq_ref[...] += jnp.sum(h * h, axis=0, keepdims=True)


def mlp_fwd_kernel(x_ref, w1_ref, sum_ref, sumsq_ref, gamma_ref, beta_ref,
                   w2_ref, b2_ref, o_ref, *, inv_n):
    """Pass 2: recompute h, normalize with global batch stats, ReLU, Linear(512->10)."""
    h = jnp.dot(x_ref[...], w1_ref[...], preferred_element_type=jnp.float32)   # (TN, 512) f32

    # Training-mode BatchNorm from the global statistics; affine folded into one scale.
    mean = sum_ref[...] * inv_n                                                 # (1, 512)
    var = jnp.maximum(sumsq_ref[...] * inv_n - mean * mean, 0.0)                # biased var
    s = gamma_ref[...] * lax.rsqrt(var + BN_EPS)                                # EUP rsqrt
    a = jnp.maximum((h - mean) * s + beta_ref[...], 0.0)                        # (TN, 512)

    # Linear(512 -> 10), zero-padded to a lane-dense 128-wide output tile.
    out = jnp.dot(a.astype(jnp.bfloat16), w2_ref[...],
                  preferred_element_type=jnp.float32) + b2_ref[...]
    o_ref[...] = out.astype(o_ref.dtype)


# ---------------------------------------------------------------------------
# Wrapper
# ---------------------------------------------------------------------------
def prepare_params(w1, b1, gamma, beta, w2, b2):
    """One-time parameter prep (hoisted out of the forward pass): bf16 MXU weights,
    lane-dense-padded second layer, b1 dropped (cancels under training-mode BN)."""
    del b1  # cancels exactly under the batch-mean subtraction (training-mode BN)
    w1_bf = w1.astype(jnp.bfloat16)
    w2p = jnp.pad(w2, ((0, 0), (0, OUT_PADDED - w2.shape[1]))).astype(jnp.bfloat16)
    b2p = jnp.pad(b2, ((0, 0), (0, OUT_PADDED - b2.shape[1]))).astype(jnp.float32)
    return w1_bf, gamma.astype(jnp.float32), beta.astype(jnp.float32), w2p, b2p


def mlp_v2_forward(x, prepared):
    w1_bf, gamma, beta, w2p, b2p = prepared
    n = x.shape[0]
    tn, vmem_limit = _tile_config(n)
    num_tiles = -(-n // tn)
    n_pad = num_tiles * tn

    x_bf = x.astype(jnp.bfloat16)
    if n_pad != n:
        # Zero-row padding is safe: with b1 folded away, padded rows contribute exactly
        # 0 to the BN sum / sum-of-squares (we divide by the true batch size below).
        x_bf = jnp.pad(x_bf, ((0, n_pad - n), (0, 0)))

    const = lambda i: (0, 0)      # weights / stats stay VMEM-resident across the grid
    row_tile = lambda i: (i, 0)

    # --- Pass 1: BN batch statistics (sum, sum of squares) over all batch tiles ---
    bn_sum, bn_sumsq = pl.pallas_call(
        bn_stats_kernel,
        out_shape=(jax.ShapeDtypeStruct((1, HIDDEN), jnp.float32),
                   jax.ShapeDtypeStruct((1, HIDDEN), jnp.float32)),
        grid=(num_tiles,),
        in_specs=[pl.BlockSpec((tn, IN_FEATURES), row_tile),
                  pl.BlockSpec((IN_FEATURES, HIDDEN), const)],
        out_specs=(pl.BlockSpec((1, HIDDEN), const),
                   pl.BlockSpec((1, HIDDEN), const)),
        compiler_params=pltpu.CompilerParams(
            dimension_semantics=("arbitrary",),   # accumulating outputs: single writer
            vmem_limit_bytes=vmem_limit),
    )(x_bf, w1_bf)

    # --- Pass 2: normalize + ReLU + Linear(512 -> 10), batch tiles independent ---
    out_padded = pl.pallas_call(
        functools.partial(mlp_fwd_kernel, inv_n=1.0 / n),
        out_shape=jax.ShapeDtypeStruct((n_pad, OUT_PADDED), jnp.float32),
        grid=(num_tiles,),
        in_specs=[pl.BlockSpec((tn, IN_FEATURES), row_tile),
                  pl.BlockSpec((IN_FEATURES, HIDDEN), const),
                  pl.BlockSpec((1, HIDDEN), const),
                  pl.BlockSpec((1, HIDDEN), const),
                  pl.BlockSpec((1, HIDDEN), const),
                  pl.BlockSpec((1, HIDDEN), const),
                  pl.BlockSpec((HIDDEN, OUT_PADDED), const),
                  pl.BlockSpec((1, OUT_PADDED), const)],
        out_specs=pl.BlockSpec((tn, OUT_PADDED), row_tile),
        compiler_params=pltpu.CompilerParams(
            dimension_semantics=("parallel",),    # shards batch tiles across v7x's 2 TCs
            vmem_limit_bytes=vmem_limit),
    )(x_bf, w1_bf, bn_sum, bn_sumsq, gamma, beta, w2p, b2p)

    return out_padded[:n, :OUT_FEATURES]


# ---------------------------------------------------------------------------
# Params + demo / correctness check
# ---------------------------------------------------------------------------
def init_params(key):
    """Deterministic PyTorch-style init: U(-1/sqrt(fan_in), 1/sqrt(fan_in))."""
    k1, k2, k3, k4 = jax.random.split(key, 4)
    in1, hid, out = IN_FEATURES, HIDDEN, OUT_FEATURES

    bound1 = 1.0 / jnp.sqrt(jnp.float32(in1))
    w1 = jax.random.uniform(k1, (in1, hid), jnp.float32, -bound1, bound1)
    b1 = jax.random.uniform(k2, (1, hid), jnp.float32, -bound1, bound1)

    gamma = jnp.ones((1, hid), jnp.float32)
    beta = jnp.zeros((1, hid), jnp.float32)

    bound2 = 1.0 / jnp.sqrt(jnp.float32(hid))
    w2 = jax.random.uniform(k3, (hid, out), jnp.float32, -bound2, bound2)
    b2 = jax.random.uniform(k4, (1, out), jnp.float32, -bound2, bound2)

    return w1, b1, gamma, beta, w2, b2


if __name__ == "__main__":
    key = jax.random.PRNGKey(0)
    key_x, key_p = jax.random.split(key)

    batch = 8
    x = jax.random.normal(key_x, (batch, IN_FEATURES), jnp.float32)
    w1, b1, gamma, beta, w2, b2 = init_params(key_p)

    prepared = prepare_params(w1, b1, gamma, beta, w2, b2)
    out = mlp_v2_forward(x, prepared)
    jax.block_until_ready(out)

    # Pure-JAX f32 reference matching PyTorch exactly (with b1, training-mode BatchNorm).
    h = x @ w1 + b1
    mean = jnp.mean(h, axis=0, keepdims=True)
    var = jnp.mean((h - mean) ** 2, axis=0, keepdims=True)
    a = jnp.maximum((h - mean) / jnp.sqrt(var + BN_EPS) * gamma + beta, 0.0)
    ref = a @ w2 + b2

    assert out.shape == (batch, OUT_FEATURES)
    # Tolerance loosened vs. the pure-f32 version because MXU operands are bf16
    # (BN statistics / scale / shift are still computed in f32).
    assert jnp.allclose(out, ref, atol=3e-2, rtol=3e-2), "mismatch vs reference"
    print("KERNEL_OK")
</pallas_src>

<mosaic_0001>
module attributes {stable_mosaic.version = 11 : i64} {
  func.func @bn_stats_kernel(%arg0: i32, %arg1: memref<8x50xbf16, #tpu.memory_space<vmem>>, %arg2: memref<50x512xbf16, #tpu.memory_space<vmem>>, %arg3: memref<1x512xf32, #tpu.memory_space<vmem>>, %arg4: memref<1x512xf32, #tpu.memory_space<vmem>>) attributes {dimension_semantics = [#tpu.dimension_semantics<arbitrary>], iteration_bounds = array<i64: 1>, scalar_prefetch = 0 : i64, scratch_operands = 0 : i64, tpu.core_type = #tpu.core_type<tc>, window_params = [{transform_indices = @transform_0, window_bounds = array<i64: 8, 50>}, {pipeline_mode = #tpu.pipeline_mode<synchronous>, transform_indices = @transform_1, window_bounds = array<i64: 50, 512>}, {pipeline_mode = #tpu.pipeline_mode<synchronous>, transform_indices = @transform_2, window_bounds = array<i64: 1, 512>}, {pipeline_mode = #tpu.pipeline_mode<synchronous>, transform_indices = @transform_3, window_bounds = array<i64: 1, 512>}]} {
    %c0_i32 = arith.constant 0 : i32
    %0 = arith.cmpi eq, %arg0, %c0_i32 : i32
    %1 = arith.extui %0 : i1 to i32
    %c0_i32_0 = arith.constant 0 : i32
    %2 = arith.cmpi ne, %1, %c0_i32_0 : i32
    scf.if %2 {
      %cst_14 = arith.constant 0.000000e+00 : f32
      %17 = vector.broadcast %cst_14 : f32 to vector<1x512xf32>
      %c0_15 = arith.constant 0 : index
      %c0_16 = arith.constant 0 : index
      %18 = vector.load %arg3[%c0_15, %c0_16] : memref<1x512xf32, #tpu.memory_space<vmem>>, vector<1x512xf32>
      tpu.vector_store %arg3[%c0_15, %c0_16], %17 {strides = array<i32>} : memref<1x512xf32, #tpu.memory_space<vmem>>, vector<1x512xf32>,
      %cst_17 = arith.constant 0.000000e+00 : f32
      %19 = vector.broadcast %cst_17 : f32 to vector<1x512xf32>
      %c0_18 = arith.constant 0 : index
      %c0_19 = arith.constant 0 : index
      %20 = vector.load %arg4[%c0_18, %c0_19] : memref<1x512xf32, #tpu.memory_space<vmem>>, vector<1x512xf32>
      tpu.vector_store %arg4[%c0_18, %c0_19], %19 {strides = array<i32>} : memref<1x512xf32, #tpu.memory_space<vmem>>, vector<1x512xf32>,
    } else {
    }
    %c0 = arith.constant 0 : index
    %c0_1 = arith.constant 0 : index
    %3 = vector.load %arg1[%c0, %c0_1] : memref<8x50xbf16, #tpu.memory_space<vmem>>, vector<8x50xbf16>
    %c0_2 = arith.constant 0 : index
    %c0_3 = arith.constant 0 : index
    %4 = vector.load %arg2[%c0_2, %c0_3] : memref<50x512xbf16, #tpu.memory_space<vmem>>, vector<50x512xbf16>
    %cst = arith.constant dense<0.000000e+00> : vector<8x512xf32>
    %5 = tpu.matmul %3, %4, %cst {dimension_numbers = #tpu.dot_dimension_numbers<[1], [0], [0], [1], [0, 0, 1, 1], [], []>} : vector<8x50xbf16>, vector<50x512xbf16>, vector<8x512xf32> -> vector<8x512xf32>
    %c0_4 = arith.constant 0 : index
    %c0_5 = arith.constant 0 : index
    %6 = vector.load %arg3[%c0_4, %c0_5] : memref<1x512xf32, #tpu.memory_space<vmem>>, vector<1x512xf32>
    %cst_6 = arith.constant dense<0.000000e+00> : vector<512xf32>
    %7 = vector.multi_reduction <add>, %5, %cst_6 [0] : vector<8x512xf32> to vector<512xf32>
    %8 = vector.shape_cast %7 : vector<512xf32> to vector<1x512xf32>
    %9 = arith.addf %6, %8 : vector<1x512xf32>
    %c0_7 = arith.constant 0 : index
    %c0_8 = arith.constant 0 : index
    %10 = vector.load %arg3[%c0_7, %c0_8] : memref<1x512xf32, #tpu.memory_space<vmem>>, vector<1x512xf32>
    tpu.vector_store %arg3[%c0_7, %c0_8], %9 {strides = array<i32>} : memref<1x512xf32, #tpu.memory_space<vmem>>, vector<1x512xf32>,
    %c0_9 = arith.constant 0 : index
    %c0_10 = arith.constant 0 : index
    %11 = vector.load %arg4[%c0_9, %c0_10] : memref<1x512xf32, #tpu.memory_space<vmem>>, vector<1x512xf32>
    %12 = arith.mulf %5, %5 : vector<8x512xf32>
    %cst_11 = arith.constant dense<0.000000e+00> : vector<512xf32>
    %13 = vector.multi_reduction <add>, %12, %cst_11 [0] : vector<8x512xf32> to vector<512xf32>
    %14 = vector.shape_cast %13 : vector<512xf32> to vector<1x512xf32>
    %15 = arith.addf %11, %14 : vector<1x512xf32>
    %c0_12 = arith.constant 0 : index
    %c0_13 = arith.constant 0 : index
    %16 = vector.load %arg4[%c0_12, %c0_13] : memref<1x512xf32, #tpu.memory_space<vmem>>, vector<1x512xf32>
    tpu.vector_store %arg4[%c0_12, %c0_13], %15 {strides = array<i32>} : memref<1x512xf32, #tpu.memory_space<vmem>>, vector<1x512xf32>,
    return
  }
  func.func @transform_0(%arg0: i32) -> (i32, i32) {
    %c0_i32 = arith.constant 0 : i32
    %c0_i32_0 = arith.constant 0 : i32
    return %arg0, %c0_i32 : i32, i32
  }
  func.func @transform_1(%arg0: i32) -> (i32, i32) {
    %c0_i32 = arith.constant 0 : i32
    %c0_i32_0 = arith.constant 0 : i32
    %c0_i32_1 = arith.constant 0 : i32
    return %c0_i32, %c0_i32_0 : i32, i32
  }
  func.func @transform_2(%arg0: i32) -> (i32, i32) {
    %c0_i32 = arith.constant 0 : i32
    %c0_i32_0 = arith.constant 0 : i32
    %c0_i32_1 = arith.constant 0 : i32
    return %c0_i32, %c0_i32_0 : i32, i32
  }
  func.func @transform_3(%arg0: i32) -> (i32, i32) {
    %c0_i32 = arith.constant 0 : i32
    %c0_i32_0 = arith.constant 0 : i32
    %c0_i32_1 = arith.constant 0 : i32
    return %c0_i32, %c0_i32_0 : i32, i32
  }
}

</mosaic_0001>

<llo_original>
// kernel: tpu_custom_call.1
$region0: #{tpu_custom_call.1}
  #allocation0 [shape = 'u32[]', space=smem, size = 0x4, offset = 0x4, fixed_abs, tag = 'smem constant byte address 0x4 - core index']
  #allocation1 [shape = 'u32[72,128]{1,0:T(1,128)}', space=vmem, size = 0x9000, scoped, tag = 'internal scratch']
  %s0 = inlined_call_operand.hbm [shape: bf16[8,50], index: 0, kind: input, shape index: {}]
  %s1 = inlined_call_operand.hbm [shape: bf16[50,512], index: 1, kind: input, shape index: {}]
  %s2 = inlined_call_operand.hbm [shape: f32[1,512], index: 2, kind: output, shape index: {0}]
  %s3 = inlined_call_operand.hbm [shape: f32[1,512], index: 3, kind: output, shape index: {1}]
  %4 = xla_tuple %s2, %s3
  %s5 = sld [smem:[#allocation0]]
  $region38: #{tpu_custom_call.1} parent=0
    _
  %s7 = ssub.s32 1, %s5
  %s8 = scalar_select 0, %s7, %s5
  $region1: #{tpu_custom_call.1} parent=0
    #allocation2 [shape = 'u8[2048]{0}', space=vmem, size = 0x800, scoped, tag = 'input window, operand 0, single buffered']
    #allocation3 [shape = 's32[1]{0}', space=sflag, size = 0x4, scoped, tag = 'scoped memory for tpu_custom_call.1']
    #allocation4 [shape = 's32[1]{0}', space=sflag, size = 0x4, scoped, tag = 'scoped memory for tpu_custom_call.1']
    #allocation5 [shape = 'u8[57344]{0}', space=vmem, size = 0xe000, scoped, tag = 'input window, operand 1, single buffered']
    #allocation6 [shape = 's32[1]{0}', space=sflag, size = 0x4, scoped, tag = 'scoped memory for tpu_custom_call.1']
    #allocation7 [shape = 'u8[2048]{0}', space=vmem, size = 0x800, scoped, tag = 'output window, operand 0, single buffered']
    #allocation8 [shape = 'u8[2048]{0}', space=vmem, size = 0x800, scoped, tag = 'output window, operand 1, single buffered']
    #allocation9 [shape = 's32[1]{0}', space=sflag, size = 0x4, scoped, tag = 'scoped memory for tpu_custom_call.1']
    %9 = vsyncpa [#allocation3], 0
    %10 = vsyncpa [#allocation6], 0
    %11 = vsyncpa [#allocation4], 0
    %12 = vsyncpa [#allocation9], 0
    // Predicated region
    $region2: #{tpu_custom_call.1} parent=1 // pred_check
      _
    $region3: #{tpu_custom_call.1} parent=1 // pred_check_branch
      %14 = sbr.rel (0) target = $region5
    $region4: #{tpu_custom_call.1} parent=1 // pred_region
      %16 = vsyncadd [#allocation3], 0
      %s18 = sshll.u32 %s0, 4
      %s19 = int_to_ptr.hbm [resolvable:$true] %s18
      %s20 = sshll.u32 [#allocation2], 4
      %s21 = int_to_ptr.vmem [resolvable:$true] %s20
      %23 = dma.hbm_to_vmem [thread:$0]  %s19, 64, %s21, [#allocation3]
    $region5: #{tpu_custom_call.1} parent=1 // pred_fallthru
      _
    // Predicated region
    $region6: #{tpu_custom_call.1} parent=1 // pred_check
      _
    $region7: #{tpu_custom_call.1} parent=1 // pred_check_branch
      %25 = sbr.rel (0) target = $region9
    $region8: #{tpu_custom_call.1} parent=1 // pred_region
      %27 = vsyncadd [#allocation6], 0
      %s28 = sshll.u32 %s1, 4
      %s29 = int_to_ptr.hbm [resolvable:$true] %s28
      %s30 = sshll.u32 [#allocation5], 4
      %s31 = int_to_ptr.vmem [resolvable:$true] %s30
      %36 = dma.hbm_to_vmem [thread:$0]  %s29, 1792, %s31, [#allocation6], 256, 256, 16
    $region9: #{tpu_custom_call.1} parent=1 // pred_fallthru
      _
    // Predicated region
    $region10: #{tpu_custom_call.1} parent=1 // pred_check
      _
    $region11: #{tpu_custom_call.1} parent=1 // pred_check_branch
      %38 = sbr.rel (0) target = $region13
    $region12: #{tpu_custom_call.1} parent=1 // pred_region
      %40 = dma.done [#allocation3], 64
    $region13: #{tpu_custom_call.1} parent=1 // pred_fallthru
      _
    // Predicated region
    $region14: #{tpu_custom_call.1} parent=1 // pred_check
      _
    $region15: #{tpu_custom_call.1} parent=1 // pred_check_branch
      %42 = sbr.rel (0) target = $region17
    $region16: #{tpu_custom_call.1} parent=1 // pred_region
      %44 = dma.done [#allocation6], 1792
    $region17: #{tpu_custom_call.1} parent=1 // pred_fallthru
      _
    %p46 = scmp.eq.s32.totalorder 0, 0
    // Predicated region
    $region18: #{tpu_custom_call.1} parent=1 // pred_check
      %p47 = pneg %p46
    $region19: #{tpu_custom_call.1} parent=1 // pred_check_branch
      %49 = sbr.rel (%p47) target = $region21
    $region20: #{tpu_custom_call.1} parent=1 // pred_region
      %v50 = vlaneseq
      %vm51 = vcmp.ge.s32.totalorder %v50, 0
      %vm52 = vcmp.lt.s32.totalorder %v50, 512
      %vm53 = vmand %vm51, %vm52
      %54 = vst.msk [vmem:[#allocation7] sm:$0xf] %vm53, 0.0
      %55 = vst.msk [vmem:[#allocation8] sm:$0xf] %vm53, 0.0
    $region21: #{tpu_custom_call.1} parent=1 // pred_fallthru
      _
    %v56 = vld [vmem:[#allocation2] sm:$0xf]
    %v57 = vld [vmem:[#allocation5] sm:$0xff]
    %v58 = vld [vmem:[#allocation5 + $0x8] sm:$0xff]
    %v59 = vld [vmem:[#allocation5 + $0x10] sm:$0xff]
    %v60 = vld [vmem:[#allocation5 + $0x18] sm:$0xff]
    %v61 = vld [vmem:[#allocation5 + $0x20] sm:$0xff]
    %v62 = vld [vmem:[#allocation5 + $0x28] sm:$0xff]
    %v63 = vld [vmem:[#allocation5 + $0x30] sm:$0xff]
    %v64 = vld [vmem:[#allocation5 + $0x38] sm:$0xff]
    %v65 = vld [vmem:[#allocation5 + $0x40] sm:$0xff]
    %v66 = vld [vmem:[#allocation5 + $0x48] sm:$0xff]
    %v67 = vld [vmem:[#allocation5 + $0x50] sm:$0xff]
    %v68 = vld [vmem:[#allocation5 + $0x58] sm:$0xff]
    %v69 = vld [vmem:[#allocation5 + $0x60] sm:$0x11]
    %v70 = vld [vmem:[#allocation5 + $0x68] sm:$0x11]
    %v85 = vunpack.c.l.b16 %v57
    %v86 = vunpack.c.h.b16 %v57
    %v87 = vunpack.c.l.b16 %v58
    %v88 = vunpack.c.h.b16 %v58
    %v89 = vunpack.c.l.b16 %v59
    %v90 = vunpack.c.h.b16 %v59
    %v91 = vunpack.c.l.b16 %v60
    %v92 = vunpack.c.h.b16 %v60
    %v93 = vunpack.c.l.b16 %v61
    %v94 = vunpack.c.h.b16 %v61
    %v95 = vunpack.c.l.b16 %v62
    %v96 = vunpack.c.h.b16 %v62
    %v97 = vunpack.c.l.b16 %v63
    %v98 = vunpack.c.h.b16 %v63
    %v99 = vunpack.c.l.b16 %v64
    %v100 = vunpack.c.h.b16 %v64
    %v101 = vunpack.c.l.b16 %v65
    %v102 = vunpack.c.h.b16 %v65
    %v103 = vunpack.c.l.b16 %v66
    %v104 = vunpack.c.h.b16 %v66
    %v105 = vunpack.c.l.b16 %v67
    %v106 = vunpack.c.h.b16 %v67
    %v107 = vunpack.c.l.b16 %v68
    %v108 = vunpack.c.h.b16 %v68
    %v109 = vunpack.c.l.b16 %v69
    %v110 = vunpack.c.h.b16 %v69
    %v111 = vunpack.c.l.b16 %v70
    %v112 = vunpack.c.h.b16 %v70
    %v113 = vpack.c.b16 %v89, %v85
    %v114 = vpack.c.b16 %v90, %v86
    %v115 = vpack.c.b16 %v91, %v87
    %v116 = vpack.c.b16 %v92, %v88
    %v117 = vpack.c.b16 %v97, %v93
    %v118 = vpack.c.b16 %v98, %v94
    %v119 = vpack.c.b16 %v99, %v95
    %v120 = vpack.c.b16 %v100, %v96
    %v121 = vpack.c.b16 %v105, %v101
    %v122 = vpack.c.b16 %v106, %v102
    %v123 = vpack.c.b16 %v107, %v103
    %v124 = vpack.c.b16 %v108, %v104
    %v125 = vpack.c.b16 %v109, %v109
    %v126 = vpack.c.b16 %v110, %v110
    %v127 = vpack.c.b16 %v111, %v111
    %v128 = vpack.c.b16 %v112, %v112
    %vm141 = vcmask 408576
    %v143 = vsel %vm141, %v56, 0
    %vm145 = vcmask 1040384
    %v147 = vsel %vm145, %v125, 0
    %v150 = vsel %vm145, %v126, 0
    %v153 = vsel %vm145, %v127, 0
    %v156 = vsel %vm145, %v128, 0
    %158 = vmatpush.bf16.msra.mxu0 0
    %159 = vmatpush.bf16.msra.mxu0 0
    %160 = vmatpush.bf16.msra.mxu0 0
    %161 = vmatpush.bf16.msra.mxu0 0
    %162 = vmatpush.bf16.msra.mxu0 %v147
    %163 = vmatpush.bf16.msra.mxu0 %v121
    %164 = vmatpush.bf16.msra.mxu0 %v117
    %165 = vmatpush.bf16.msra.mxu0 %v113
    %166 = vmatmul.bf16.gmra.mxu0 %v143
    %v167 = vpop.f32.mrf.mxu0
    %v168 = vadd.f32 0.0, %v167
    %v169 = vpop.f32.mrf.mxu0
    %170 = vdwg.mxu0
    %171 = vmatpush.bf16.msra.mxu0 0
    %172 = vmatpush.bf16.msra.mxu0 0
    %173 = vmatpush.bf16.msra.mxu0 0
    %174 = vmatpush.bf16.msra.mxu0 0
    %175 = vmatpush.bf16.msra.mxu0 %v150
    %176 = vmatpush.bf16.msra.mxu0 %v122
    %177 = vmatpush.bf16.msra.mxu0 %v118
    %178 = vmatpush.bf16.msra.mxu0 %v114
    %179 = vmatmul.bf16.gmra.mxu0 %v143
    %v180 = vpop.f32.mrf.mxu0
    %v181 = vadd.f32 0.0, %v180
    %v182 = vpop.f32.mrf.mxu0
    %183 = vdwg.mxu0
    %184 = vmatpush.bf16.msra.mxu0 0
    %185 = vmatpush.bf16.msra.mxu0 0
    %186 = vmatpush.bf16.msra.mxu0 0
    %187 = vmatpush.bf16.msra.mxu0 0
    %188 = vmatpush.bf16.msra.mxu0 %v153
    %189 = vmatpush.bf16.msra.mxu0 %v123
    %190 = vmatpush.bf16.msra.mxu0 %v119
    %191 = vmatpush.bf16.msra.mxu0 %v115
    %192 = vmatmul.bf16.gmra.mxu0 %v143
    %v193 = vpop.f32.mrf.mxu0
    %v194 = vadd.f32 0.0, %v193
    %v195 = vpop.f32.mrf.mxu0
    %196 = vdwg.mxu0
    %197 = vmatpush.bf16.msra.mxu0 0
    %198 = vmatpush.bf16.msra.mxu0 0
    %199 = vmatpush.bf16.msra.mxu0 0
    %200 = vmatpush.bf16.msra.mxu0 0
    %201 = vmatpush.bf16.msra.mxu0 %v156
    %202 = vmatpush.bf16.msra.mxu0 %v124
    %203 = vmatpush.bf16.msra.mxu0 %v120
    %204 = vmatpush.bf16.msra.mxu0 %v116
    %205 = vmatmul.bf16.gmra.mxu0 %v143
    %v206 = vpop.f32.mrf.mxu0
    %v207 = vadd.f32 0.0, %v206
    %v208 = vpop.f32.mrf.mxu0
    %209 = vdwg.mxu0
    %v210 = vld [vmem:[#allocation7] sm:$0xf]
    %v211 = vrot.slane %v168, 4
    %v212 = vadd.f32 %v168, %v211
    %v213 = vrot.slane %v212, 2
    %v214 = vadd.f32 %v212, %v213
    %v215 = vrot.slane %v214, 1
    %v216 = vadd.f32 %v214, %v215
    %v217 = vrot.slane %v181, 4
    %v218 = vadd.f32 %v181, %v217
    %v219 = vrot.slane %v218, 2
    %v220 = vadd.f32 %v218, %v219
    %v221 = vrot.slane %v220, 1
    %v222 = vadd.f32 %v220, %v221
    %v223 = vrot.slane %v194, 4
    %v224 = vadd.f32 %v194, %v223
    %v225 = vrot.slane %v224, 2
    %v226 = vadd.f32 %v224, %v225
    %v227 = vrot.slane %v226, 1
    %v228 = vadd.f32 %v226, %v227
    %v229 = vrot.slane %v207, 4
    %v230 = vadd.f32 %v207, %v229
    %v231 = vrot.slane %v230, 2
    %v232 = vadd.f32 %v230, %v231
    %v233 = vrot.slane %v232, 1
    %v234 = vadd.f32 %v232, %v233
    %v239 = vrot.slane %v222, 7
    %v240 = vrot.slane %v228, 6
    %v241 = vrot.slane %v234, 5
    %v242 = vsel %vm145, %v216, %v239
    %vm243 = vcmask 1042434
    %v244 = vsel %vm243, %v240, %v241
    %vm245 = vcmask 1041408
    %v246 = vsel %vm245, %v242, %v244
    %v248 = vadd.f32 %v210, %v246
    %v249 = vlaneseq
    %vm250 = vcmp.ge.s32.totalorder %v249, 0
    %vm251 = vcmp.lt.s32.totalorder %v249, 512
    %vm252 = vmand %vm250, %vm251
    %253 = vst.msk [vmem:[#allocation7] sm:$0xf] %vm252, %v248
    %v254 = vld [vmem:[#allocation8] sm:$0xf]
    %v255 = vmul.f32 %v168, %v168
    %v256 = vmul.f32 %v181, %v181
    %v257 = vmul.f32 %v194, %v194
    %v258 = vmul.f32 %v207, %v207
    %v259 = vrot.slane %v255, 4
    %v260 = vadd.f32 %v255, %v259
    %v261 = vrot.slane %v260, 2
    %v262 = vadd.f32 %v260, %v261
    %v263 = vrot.slane %v262, 1
    %v264 = vadd.f32 %v262, %v263
    %v265 = vrot.slane %v256, 4
    %v266 = vadd.f32 %v256, %v265
    %v267 = vrot.slane %v266, 2
    %v268 = vadd.f32 %v266, %v267
    %v269 = vrot.slane %v268, 1
    %v270 = vadd.f32 %v268, %v269
    %v271 = vrot.slane %v257, 4
    %v272 = vadd.f32 %v257, %v271
    %v273 = vrot.slane %v272, 2
    %v274 = vadd.f32 %v272, %v273
    %v275 = vrot.slane %v274, 1
    %v276 = vadd.f32 %v274, %v275
    %v277 = vrot.slane %v258, 4
    %v278 = vadd.f32 %v258, %v277
    %v279 = vrot.slane %v278, 2
    %v280 = vadd.f32 %v278, %v279
    %v281 = vrot.slane %v280, 1
    %v282 = vadd.f32 %v280, %v281
    %v287 = vrot.slane %v270, 7
    %v288 = vrot.slane %v276, 6
    %v289 = vrot.slane %v282, 5
    %v290 = vsel %vm145, %v264, %v287
    %v291 = vsel %vm243, %v288, %v289
    %v292 = vsel %vm245, %v290, %v291
    %v294 = vadd.f32 %v254, %v292
    %295 = vst.msk [vmem:[#allocation8] sm:$0xf] %vm252, %v294
    // Predicated region
    $region22: #{tpu_custom_call.1} parent=1 // pred_check
      _
    $region23: #{tpu_custom_call.1} parent=1 // pred_check_branch
      %297 = sbr.rel (0) target = $region25
    $region24: #{tpu_custom_call.1} parent=1 // pred_region
      %299 = vsyncadd [#allocation4], 0
      %s301 = sshll.u32 [#allocation7], 4
      %s302 = int_to_ptr.vmem [resolvable:$true] %s301
      %s303 = sshll.u32 %s2, 4
      %s304 = int_to_ptr.hbm [resolvable:$true] %s303
      %306 = dma.vmem_to_hbm [thread:$0]  %s302, 64, %s304, [#allocation4]
    $region25: #{tpu_custom_call.1} parent=1 // pred_fallthru
      _
    // Predicated region
    $region26: #{tpu_custom_call.1} parent=1 // pred_check
      _
    $region27: #{tpu_custom_call.1} parent=1 // pred_check_branch
      %308 = sbr.rel (0) target = $region29
    $region28: #{tpu_custom_call.1} parent=1 // pred_region
      %310 = vsyncadd [#allocation9], 0
      %s312 = sshll.u32 [#allocation8], 4
      %s313 = int_to_ptr.vmem [resolvable:$true] %s312
      %s314 = sshll.u32 %s3, 4
      %s315 = int_to_ptr.hbm [resolvable:$true] %s314
      %317 = dma.vmem_to_hbm [thread:$0]  %s313, 64, %s315, [#allocation9]
    $region29: #{tpu_custom_call.1} parent=1 // pred_fallthru
      _
    // Predicated region
    $region30: #{tpu_custom_call.1} parent=1 // pred_check
      _
    $region31: #{tpu_custom_call.1} parent=1 // pred_check_branch
      %319 = sbr.rel (0) target = $region33
    $region32: #{tpu_custom_call.1} parent=1 // pred_region
      %321 = dma.done [#allocation4], 64
    $region33: #{tpu_custom_call.1} parent=1 // pred_fallthru
      _
    // Predicated region
    $region34: #{tpu_custom_call.1} parent=1 // pred_check
      _
    $region35: #{tpu_custom_call.1} parent=1 // pred_check_branch
      %323 = sbr.rel (0) target = $region37
    $region36: #{tpu_custom_call.1} parent=1 // pred_region
      %325 = dma.done [#allocation9], 64
    $region37: #{tpu_custom_call.1} parent=1 // pred_fallthru
      _
    %326 = vsyncpa [#allocation3], 1
    %327 = vsyncpa [#allocation6], 1
    %328 = vsyncpa [#allocation4], 1
    %329 = vsyncpa [#allocation9], 1

</llo_original>
